<compile_context>
chip_gen: v7x
topology: tpu7x:2x2x1
jax: 0.10.0
libtpu: 0.0.40
codegen_flags: <defaults>
</compile_context>

<pallas_src>
import jax
import jax.numpy as jnp
from jax.experimental import pallas as pl
from jax.experimental.pallas import tpu as pltpu

NEG_SLOPE = 0.01   # torch.nn.LeakyReLU default negative_slope
LN_EPS = 1e-5      # torch.nn.LayerNorm default eps


def _leaky_relu(x):
    return jnp.where(x >= 0, x, NEG_SLOPE * x)


def base_mean_kernel(x_ref, gamma_ref, beta_ref, out_ref):
    """One batch-tile per grid step.

    x_ref    : (TB, N, D)      input embeddings tile
    gamma_ref: (1, 1, D)       LayerNorm weight
    beta_ref : (1, 1, D)       LayerNorm bias
    out_ref  : (TB, N-1, 2*D)  fused [adj[:,1:,:] | LayerNorm(adj2)[:,1:,:]]
    """
    x = x_ref[...].astype(jnp.float32)                     # (TB, N, D)
    n = x.shape[1]
    d = x.shape[2]
    inv_n = 1.0 / n

    # --- base_mp: mean over seq, elementwise mul, LeakyReLU ---
    mu = jnp.sum(x, axis=1, keepdims=True) * inv_n         # (TB, 1, D)
    adj = _leaky_relu(x * mu)                              # (TB, N, D)

    # --- base_mp_norm applied to adj; row 0 of adj2 is discarded, so only
    #     compute it on the rows we keep (mu2 still uses ALL rows of adj). ---
    mu2 = jnp.sum(adj, axis=1, keepdims=True) * inv_n      # (TB, 1, D)
    adj_keep = adj[:, 1:, :]                               # (TB, N-1, D) sublane-shifted copy (single use)
    adj2 = _leaky_relu(adj_keep * mu2)                     # (TB, N-1, D)

    # LayerNorm over the hidden dim (PyTorch defaults, affine params passed in).
    m = jnp.mean(adj2, axis=-1, keepdims=True)
    c = adj2 - m
    var = jnp.mean(c * c, axis=-1, keepdims=True)
    inv = jax.lax.rsqrt(var + LN_EPS)
    gamma = gamma_ref[...].astype(jnp.float32)             # (1, 1, D)
    beta = beta_ref[...].astype(jnp.float32)               # (1, 1, D)
    adj2_n = c * inv * gamma + beta                        # (TB, N-1, D)

    if d % 128 == 0:
        # Lane-aligned halves: two unmasked half-width writes.
        out_ref[:, :, :d] = adj_keep.astype(out_ref.dtype)
        out_ref[:, :, d:] = adj2_n.astype(out_ref.dtype)
    else:
        # Sub-128 hidden dim: fuse the concat and do ONE full-block store
        # (single 2*D-lane vst stream instead of two masked D-lane streams).
        out_ref[...] = jnp.concatenate(
            [adj_keep, adj2_n], axis=-1).astype(out_ref.dtype)


def _pick_batch_tile(B, N, D, in_bytes, out_bytes, vmem_budget):
    """Rows-per-step: fit the pipelined tile into `vmem_budget`, then prefer an
    exact, even, >=4-step grid (balanced v7x TCs + pipeline overlap)."""
    # Per batch row: double-buffered input + double-buffered fused (2D-wide)
    # output + ~6 full-size f32 temporaries (x, adj, adj2, adj2_n, concat, slack).
    # Temporaries are ALWAYS f32 (4 B/elem), independent of the input dtype.
    per_b = N * D * (2 * in_bytes + 4 * out_bytes + 6 * 4)
    max_tb = min(B, max(1, int(vmem_budget // per_b)))
    if B <= 1 or max_tb <= 1:
        return 1

    tiny = max_tb * per_b < (1 << 20)   # whole problem tile < 1 MiB
    best_tb, best_key = 1, None
    for tb in range(1, max_tb + 1):
        steps = (B + tb - 1) // tb
        exact = (B % tb) == 0            # no ragged last tile (balanced TCs)
        even = (steps % 2) == 0          # feeds both v7x TensorCores equally
        if tiny:
            deep = steps >= min(4, B)
        else:
            deep = steps >= 4 and tb * per_b >= (1 << 20)   # >=4 steps, >=1 MiB tile
        key = (exact and even and deep, exact and even, exact, even, tb)
        if best_key is None or key > best_key:
            best_key, best_tb = key, tb
    return int(best_tb)


def _vmem_budgets():
    """(tile budget, vmem_limit_bytes) per chip generation."""
    try:
        vmem_cap = int(pltpu.get_tpu_info().vmem_capacity_bytes)
    except Exception:
        vmem_cap = 64 * 1024 * 1024     # assume smallest (v7x) if unknown
    if vmem_cap >= 100 * 1024 * 1024:   # v5e / v6e: 128 MiB physical VMEM
        return 40 * 1024 * 1024, 96 * 1024 * 1024
    return 20 * 1024 * 1024, 48 * 1024 * 1024   # v7x: 64 MiB physical VMEM


def base_mean_w_id_2_0_6(embeddings, ln_weight=None, ln_bias=None):
    """embeddings: (B, N, D) -> (B, N-1, 2*D).  LayerNorm params default to
    PyTorch init (weight=1, bias=0)."""
    B, N, D = embeddings.shape
    assert N >= 2, "need at least 2 sequence rows (row 0 is dropped)"
    out_dtype = embeddings.dtype

    if ln_weight is None:
        ln_weight = jnp.ones((D,), jnp.float32)
    if ln_bias is None:
        ln_bias = jnp.zeros((D,), jnp.float32)
    gamma = jnp.asarray(ln_weight).reshape(1, 1, D)
    beta = jnp.asarray(ln_bias).reshape(1, 1, D)

    in_bytes = int(jnp.dtype(embeddings.dtype).itemsize)
    out_bytes = int(jnp.dtype(out_dtype).itemsize)
    vmem_budget, vmem_limit = _vmem_budgets()
    tb = _pick_batch_tile(B, N, D, in_bytes, out_bytes, vmem_budget)
    grid = (pl.cdiv(B, tb),)

    # Advisory cost so XLA treats this as the bandwidth-heavy op it is.
    cost = pl.CostEstimate(
        flops=int(14 * B * N * D),
        transcendentals=int(B * (N - 1)),              # rsqrt per kept row
        bytes_accessed=int(B * N * D * in_bytes
                           + B * (N - 1) * 2 * D * out_bytes
                           + 2 * D * 4),
    )

    out = pl.pallas_call(
        base_mean_kernel,
        out_shape=jax.ShapeDtypeStruct((B, N - 1, 2 * D), out_dtype),
        grid_spec=pltpu.PrefetchScalarGridSpec(
            num_scalar_prefetch=0,
            grid=grid,
            in_specs=[
                pl.BlockSpec((tb, N, D), lambda b: (b, 0, 0)),
                pl.BlockSpec((1, 1, D), lambda b: (0, 0, 0)),
                pl.BlockSpec((1, 1, D), lambda b: (0, 0, 0)),
            ],
            out_specs=pl.BlockSpec((tb, N - 1, 2 * D), lambda b: (b, 0, 0)),
        ),
        compiler_params=pltpu.CompilerParams(
            dimension_semantics=("parallel",),
            vmem_limit_bytes=vmem_limit,
        ),
        cost_estimate=cost,
    )(embeddings, gamma, beta)
    return out


def _reference(embeddings, ln_weight, ln_bias):
    """Pure-JAX reference mirroring the PyTorch forward (eval mode)."""
    def base_mp(ems):
        mu = jnp.mean(ems, axis=1, keepdims=True)
        return _leaky_relu(ems * mu)

    adj = base_mp(embeddings)
    adj2 = base_mp(adj)
    m = jnp.mean(adj2, axis=-1, keepdims=True)
    v = jnp.mean((adj2 - m) ** 2, axis=-1, keepdims=True)
    adj2_n = (adj2 - m) / jnp.sqrt(v + LN_EPS) * ln_weight + ln_bias
    return jnp.concatenate([adj[:, 1:, :], adj2_n[:, 1:, :]], axis=-1)


if __name__ == "__main__":
    key = jax.random.PRNGKey(0)
    B, N, D = 2, 8, 32
    embeddings = jax.random.normal(key, (B, N, D), dtype=jnp.float32)
    ln_w = jnp.ones((D,), jnp.float32)   # PyTorch LayerNorm default init
    ln_b = jnp.zeros((D,), jnp.float32)

    out = base_mean_w_id_2_0_6(embeddings, ln_w, ln_b)
    out = jax.block_until_ready(out)

    ref = _reference(embeddings, ln_w, ln_b)
    assert out.shape == (B, N - 1, 2 * D), out.shape
    assert jnp.allclose(out, ref, atol=1e-5, rtol=1e-5), "mismatch vs reference"

    print("KERNEL_OK")
</pallas_src>

<mosaic_0001>
module attributes {stable_mosaic.version = 11 : i64} {
  func.func @base_mean_kernel(%arg0: i32, %arg1: memref<1x8x32xf32, #tpu.memory_space<vmem>>, %arg2: memref<1x1x32xf32, #tpu.memory_space<vmem>>, %arg3: memref<1x1x32xf32, #tpu.memory_space<vmem>>, %arg4: memref<1x7x64xf32, #tpu.memory_space<vmem>>) attributes {dimension_semantics = [#tpu.dimension_semantics<parallel>], iteration_bounds = array<i64: 2>, scalar_prefetch = 0 : i64, scratch_operands = 0 : i64, tpu.core_type = #tpu.core_type<tc>, window_params = [{transform_indices = @transform_0, window_bounds = array<i64: 1, 8, 32>}, {pipeline_mode = #tpu.pipeline_mode<synchronous>, transform_indices = @transform_1, window_bounds = array<i64: 1, 1, 32>}, {pipeline_mode = #tpu.pipeline_mode<synchronous>, transform_indices = @transform_2, window_bounds = array<i64: 1, 1, 32>}, {transform_indices = @transform_3, window_bounds = array<i64: 1, 7, 64>}]} {
    %c0 = arith.constant 0 : index
    %c0_0 = arith.constant 0 : index
    %c0_1 = arith.constant 0 : index
    %0 = vector.load %arg1[%c0, %c0_0, %c0_1] : memref<1x8x32xf32, #tpu.memory_space<vmem>>, vector<1x8x32xf32>
    %cst = arith.constant dense<0.000000e+00> : vector<1x32xf32>
    %1 = vector.multi_reduction <add>, %0, %cst [1] : vector<1x8x32xf32> to vector<1x32xf32>
    %2 = vector.shape_cast %1 : vector<1x32xf32> to vector<1x1x32xf32>
    %cst_2 = arith.constant 1.250000e-01 : f32
    %3 = vector.broadcast %cst_2 : f32 to vector<1x1x32xf32>
    %4 = arith.mulf %2, %3 : vector<1x1x32xf32>
    %5 = vector.broadcast %4 : vector<1x1x32xf32> to vector<1x8x32xf32>
    %6 = arith.mulf %0, %5 : vector<1x8x32xf32>
    %cst_3 = arith.constant 0.000000e+00 : f32
    %7 = vector.broadcast %cst_3 : f32 to vector<1x8x32xf32>
    %8 = arith.cmpf oge, %6, %7 : vector<1x8x32xf32>
    %cst_4 = arith.constant 0.00999999977 : f32
    %9 = vector.broadcast %cst_4 : f32 to vector<1x8x32xf32>
    %10 = arith.mulf %9, %6 : vector<1x8x32xf32>
    %11 = arith.select %8, %6, %10 : vector<1x8x32xi1>, vector<1x8x32xf32>
    %cst_5 = arith.constant dense<0.000000e+00> : vector<1x32xf32>
    %12 = vector.multi_reduction <add>, %11, %cst_5 [1] : vector<1x8x32xf32> to vector<1x32xf32>
    %13 = vector.shape_cast %12 : vector<1x32xf32> to vector<1x1x32xf32>
    %cst_6 = arith.constant 1.250000e-01 : f32
    %14 = vector.broadcast %cst_6 : f32 to vector<1x1x32xf32>
    %15 = arith.mulf %13, %14 : vector<1x1x32xf32>
    %16 = vector.extract_strided_slice %11 {offsets = [0, 1, 0], sizes = [1, 7, 32], strides = [1, 1, 1]} : vector<1x8x32xf32> to vector<1x7x32xf32>
    %17 = vector.broadcast %15 : vector<1x1x32xf32> to vector<1x7x32xf32>
    %18 = arith.mulf %16, %17 : vector<1x7x32xf32>
    %cst_7 = arith.constant 0.000000e+00 : f32
    %19 = vector.broadcast %cst_7 : f32 to vector<1x7x32xf32>
    %20 = arith.cmpf oge, %18, %19 : vector<1x7x32xf32>
    %cst_8 = arith.constant 0.00999999977 : f32
    %21 = vector.broadcast %cst_8 : f32 to vector<1x7x32xf32>
    %22 = arith.mulf %21, %18 : vector<1x7x32xf32>
    %23 = arith.select %20, %18, %22 : vector<1x7x32xi1>, vector<1x7x32xf32>
    %cst_9 = arith.constant dense<0.000000e+00> : vector<1x7xf32>
    %24 = vector.multi_reduction <add>, %23, %cst_9 [2] : vector<1x7x32xf32> to vector<1x7xf32>
    %25 = vector.shape_cast %24 : vector<1x7xf32> to vector<1x7x1xf32>
    %cst_10 = arith.constant 3.200000e+01 : f32
    %26 = vector.broadcast %cst_10 : f32 to vector<1x7x1xf32>
    %27 = arith.divf %25, %26 : vector<1x7x1xf32>
    %28 = vector.broadcast %27 : vector<1x7x1xf32> to vector<1x7x32xf32>
    %29 = arith.subf %23, %28 : vector<1x7x32xf32>
    %30 = arith.mulf %29, %29 : vector<1x7x32xf32>
    %cst_11 = arith.constant dense<0.000000e+00> : vector<1x7xf32>
    %31 = vector.multi_reduction <add>, %30, %cst_11 [2] : vector<1x7x32xf32> to vector<1x7xf32>
    %32 = vector.shape_cast %31 : vector<1x7xf32> to vector<1x7x1xf32>
    %cst_12 = arith.constant 3.200000e+01 : f32
    %33 = vector.broadcast %cst_12 : f32 to vector<1x7x1xf32>
    %34 = arith.divf %32, %33 : vector<1x7x1xf32>
    %cst_13 = arith.constant 9.99999974E-6 : f32
    %35 = vector.broadcast %cst_13 : f32 to vector<1x7x1xf32>
    %36 = arith.addf %34, %35 : vector<1x7x1xf32>
    %37 = math.rsqrt %36 : vector<1x7x1xf32>
    %c0_14 = arith.constant 0 : index
    %c0_15 = arith.constant 0 : index
    %c0_16 = arith.constant 0 : index
    %38 = vector.load %arg2[%c0_14, %c0_15, %c0_16] : memref<1x1x32xf32, #tpu.memory_space<vmem>>, vector<1x1x32xf32>
    %c0_17 = arith.constant 0 : index
    %c0_18 = arith.constant 0 : index
    %c0_19 = arith.constant 0 : index
    %39 = vector.load %arg3[%c0_17, %c0_18, %c0_19] : memref<1x1x32xf32, #tpu.memory_space<vmem>>, vector<1x1x32xf32>
    %40 = vector.broadcast %37 : vector<1x7x1xf32> to vector<1x7x32xf32>
    %41 = arith.mulf %29, %40 : vector<1x7x32xf32>
    %42 = vector.broadcast %38 : vector<1x1x32xf32> to vector<1x7x32xf32>
    %43 = arith.mulf %41, %42 : vector<1x7x32xf32>
    %44 = vector.broadcast %39 : vector<1x1x32xf32> to vector<1x7x32xf32>
    %45 = arith.addf %43, %44 : vector<1x7x32xf32>
    %46 = tpu.concatenate %16, %45 in 2 : vector<1x7x32xf32>, vector<1x7x32xf32> -> vector<1x7x64xf32>
    %c0_20 = arith.constant 0 : index
    %c0_21 = arith.constant 0 : index
    %c0_22 = arith.constant 0 : index
    %47 = vector.load %arg4[%c0_20, %c0_21, %c0_22] : memref<1x7x64xf32, #tpu.memory_space<vmem>>, vector<1x7x64xf32>
    tpu.vector_store %arg4[%c0_20, %c0_21, %c0_22], %46 {strides = array<i32>} : memref<1x7x64xf32, #tpu.memory_space<vmem>>, vector<1x7x64xf32>,
    return
  }
  func.func @transform_0(%arg0: i32) -> (i32, i32, i32) {
    %c0_i32 = arith.constant 0 : i32
    %c0_i32_0 = arith.constant 0 : i32
    %c0_i32_1 = arith.constant 0 : i32
    return %arg0, %c0_i32, %c0_i32_0 : i32, i32, i32
  }
  func.func @transform_1(%arg0: i32) -> (i32, i32, i32) {
    %c0_i32 = arith.constant 0 : i32
    %c0_i32_0 = arith.constant 0 : i32
    %c0_i32_1 = arith.constant 0 : i32
    %c0_i32_2 = arith.constant 0 : i32
    return %c0_i32, %c0_i32_0, %c0_i32_1 : i32, i32, i32
  }
  func.func @transform_2(%arg0: i32) -> (i32, i32, i32) {
    %c0_i32 = arith.constant 0 : i32
    %c0_i32_0 = arith.constant 0 : i32
    %c0_i32_1 = arith.constant 0 : i32
    %c0_i32_2 = arith.constant 0 : i32
    return %c0_i32, %c0_i32_0, %c0_i32_1 : i32, i32, i32
  }
  func.func @transform_3(%arg0: i32) -> (i32, i32, i32) {
    %c0_i32 = arith.constant 0 : i32
    %c0_i32_0 = arith.constant 0 : i32
    %c0_i32_1 = arith.constant 0 : i32
    return %arg0, %c0_i32, %c0_i32_0 : i32, i32, i32
  }
}

</mosaic_0001>

<llo_original>
// kernel: tpu_custom_call.1
$region0: #{tpu_custom_call.1}
  #allocation0 [shape = 'u32[]', space=smem, size = 0x4, offset = 0x4, fixed_abs, tag = 'smem constant byte address 0x4 - core index']
  #allocation1 [shape = 'u32[144,128]{1,0:T(1,128)}', space=vmem, size = 0x12000, scoped, tag = 'internal scratch']
  %s0 = inlined_call_operand.hbm [shape: f32[2,8,32], index: 0, kind: input, shape index: {}]
  %s1 = inlined_call_operand.vmem [shape: f32[1,1,32], index: 1, kind: input, shape index: {}]
  %s2 = inlined_call_operand.vmem [shape: f32[1,1,32], index: 2, kind: input, shape index: {}]
  %s3 = inlined_call_operand.vmem [shape: f32[2,7,64], index: 3, kind: output, shape index: {}]
  %s4 = sld [smem:[#allocation0]]
  $region49: #{tpu_custom_call.1} parent=0
    _
  %s6 = ssub.s32 1, %s4
  %s7 = scalar_select 0, %s6, %s4
  $region1: #{tpu_custom_call.1} parent=0
    #allocation2 [shape = 'u8[8192]{0}', space=vmem, size = 0x2000, scoped, tag = 'input window, operand 0']
    #allocation3 [shape = 's32[2]{0}', space=sflag, size = 0x8, scoped, tag = 'scoped memory for tpu_custom_call.1']
    %8 = vsyncpa [#allocation3], 0
    %s9 = scalar_lea.sflag [#allocation3], 1
    %10 = vsyncpa %s9, 0
    loop: start=0, step=1, limit=4
    $region2: #{tpu_custom_call.1} parent=1 // loop_pre_header
      _
    $region3: #{tpu_custom_call.1} parent=1 // loop_header
      %s12 = sphi 0, %s16
      %p13 = scmp.ge.s32.totalorder %s12, 4
      %s22 = sphi 0, %s24
      %s25 = sphi 0, %s22
      %s26 = sphi 0, %s25
      %s42 = sphi 0, %s26
      %s46 = sphi 0, %s46
      %s48 = sphi 0, %s46
      %s49 = sphi 0, %s48
      %s63 = sphi 0, %s49
      %s67 = sphi 0, %s67
      %s69 = sphi 0, %s67
      %s70 = sphi 0, %s69
      %s84 = sphi 0, %s70
      %s90 = sphi 0, %s92
      %s93 = sphi 0, %s90
      %s94 = sphi 0, %s93
      %s110 = sphi 0, %s94
    $region4: #{tpu_custom_call.1} parent=1 // loop_header_branch
      %15 = sbr.rel (%p13) target = $region8
    $region5: #{tpu_custom_call.1} parent=1 // loop_body
      %s17 = ssub.s32 %s12, 1
      %s18 = ssub.s32 %s12, 2
      %s19 = sadd.s32 %s12, 1
      %s20 = ssub.s32 %s12, %s19
      %p21 = scmp.eq.s32.totalorder %s20, 0
      %s23 = sadd.s32 %s22, 1
      %s24 = scalar_select %p21, %s22, %s23
      %p27 = pneg %p21
      %p28 = scmp.eq.s32.totalorder %s12, 1
      %p29 = por %p27, %p28
      %p30 = scmp.ne.s32.totalorder %s22, %s25
      %p31 = scmp.eq.s32.totalorder %s12, 0
      %p32 = por %p30, %p31
      %p33 = scmp.ne.s32.totalorder %s22, %s25
      %p34 = scmp.eq.s32.totalorder %s17, 1
      %p35 = por %p33, %p34
      %p36 = scmp.ne.s32.totalorder %s25, %s26
      %p37 = scmp.eq.s32.totalorder %s17, 0
      %p38 = por %p36, %p37
      %p39 = scmp.ne.s32.totalorder %s25, %s26
      %p40 = scmp.eq.s32.totalorder %s18, 1
      %p41 = por %p39, %p40
      %p43 = scmp.ne.s32.totalorder %s26, %s42
      %p44 = scmp.eq.s32.totalorder %s18, 0
      %p45 = por %p43, %p44
      %s47 = sadd.s32 %s46, 1
      %p50 = scmp.eq.s32.totalorder %s12, 1
      %p51 = scmp.ne.s32.totalorder %s46, %s48
      %p52 = scmp.eq.s32.totalorder %s12, 0
      %p53 = por %p51, %p52
      %p54 = scmp.ne.s32.totalorder %s46, %s48
      %p55 = scmp.eq.s32.totalorder %s17, 1
      %p56 = por %p54, %p55
      %p57 = scmp.ne.s32.totalorder %s48, %s49
      %p58 = scmp.eq.s32.totalorder %s17, 0
      %p59 = por %p57, %p58
      %p60 = scmp.ne.s32.totalorder %s48, %s49
      %p61 = scmp.eq.s32.totalorder %s18, 1
      %p62 = por %p60, %p61
      %p64 = scmp.ne.s32.totalorder %s49, %s63
      %p65 = scmp.eq.s32.totalorder %s18, 0
      %p66 = por %p64, %p65
      %s68 = sadd.s32 %s67, 1
      %p71 = scmp.eq.s32.totalorder %s12, 1
      %p72 = scmp.ne.s32.totalorder %s67, %s69
      %p73 = scmp.eq.s32.totalorder %s12, 0
      %p74 = por %p72, %p73
      %p75 = scmp.ne.s32.totalorder %s67, %s69
      %p76 = scmp.eq.s32.totalorder %s17, 1
      %p77 = por %p75, %p76
      %p78 = scmp.ne.s32.totalorder %s69, %s70
      %p79 = scmp.eq.s32.totalorder %s17, 0
      %p80 = por %p78, %p79
      %p81 = scmp.ne.s32.totalorder %s69, %s70
      %p82 = scmp.eq.s32.totalorder %s18, 1
      %p83 = por %p81, %p82
      %p85 = scmp.ne.s32.totalorder %s70, %s84
      %p86 = scmp.eq.s32.totalorder %s18, 0
      %p87 = por %p85, %p86
      %s88 = ssub.s32 %s12, %s19
      %p89 = scmp.eq.s32.totalorder %s88, 0
      %s91 = sadd.s32 %s90, 1
      %s92 = scalar_select %p89, %s90, %s91
      %p95 = pneg %p89
      %p96 = scmp.eq.s32.totalorder %s12, 1
      %p97 = por %p95, %p96
      %p98 = scmp.ne.s32.totalorder %s90, %s93
      %p99 = scmp.eq.s32.totalorder %s12, 0
      %p100 = por %p98, %p99
      %p101 = scmp.ne.s32.totalorder %s90, %s93
      %p102 = scmp.eq.s32.totalorder %s17, 1
      %p103 = por %p101, %p102
      %p104 = scmp.ne.s32.totalorder %s93, %s94
      %p105 = scmp.eq.s32.totalorder %s17, 0
      %p106 = por %p104, %p105
      %p107 = scmp.ne.s32.totalorder %s93, %s94
      %p108 = scmp.eq.s32.totalorder %s18, 1
      %p109 = por %p107, %p108
      %p111 = scmp.ne.s32.totalorder %s94, %s110
      %p112 = scmp.eq.s32.totalorder %s18, 0
      %p113 = por %p111, %p112
      %p114 = scmp.le.s32.totalorder 1, %s12
      %p115 = scmp.lt.s32.totalorder %s12, 3
      %p116 = pnand %p114, %p115
      %p117 = pneg %p116
      // Predicated region
      $region9: #{tpu_custom_call.1} parent=5 // pred_check
        _
      $region10: #{tpu_custom_call.1} parent=5 // pred_check_branch
        %119 = sbr.rel (%p116) target = $region12
      $region11: #{tpu_custom_call.1} parent=5 // pred_region
        %s120 = ssub.s32 %s12, 1
        // Predicated region
        $region13: #{tpu_custom_call.1} parent=11 // pred_check
          %p121 = pneg %p59
        $region14: #{tpu_custom_call.1} parent=11 // pred_check_branch
          %123 = sbr.rel (%p121) target = $region16
        $region15: #{tpu_custom_call.1} parent=11 // pred_region
          _
        $region16: #{tpu_custom_call.1} parent=11 // pred_fallthru
          _
        // Predicated region
        $region17: #{tpu_custom_call.1} parent=11 // pred_check
          %p124 = pneg %p80
        $region18: #{tpu_custom_call.1} parent=11 // pred_check_branch
          %126 = sbr.rel (%p124) target = $region20
        $region19: #{tpu_custom_call.1} parent=11 // pred_region
          _
        $region20: #{tpu_custom_call.1} parent=11 // pred_fallthru
          _
      $region12: #{tpu_custom_call.1} parent=5 // pred_fallthru
        _
      %p127 = scmp.lt.s32.totalorder %s12, 2
      // Predicated region
      $region21: #{tpu_custom_call.1} parent=5 // pred_check
        %p128 = pneg %p127
      $region22: #{tpu_custom_call.1} parent=5 // pred_check_branch
        %130 = sbr.rel (%p128) target = $region24
      $region23: #{tpu_custom_call.1} parent=5 // pred_region
        // Predicated region
        $region25: #{tpu_custom_call.1} parent=23 // pred_check
          %p131 = pneg %p32
        $region26: #{tpu_custom_call.1} parent=23 // pred_check_branch
          %133 = sbr.rel (%p131) target = $region28
        $region27: #{tpu_custom_call.1} parent=23 // pred_region
          %s134 = sand.u32 %s22, 1
          %s135 = scalar_lea.sflag [#allocation3], %s134
          %s136 = sand.u32 %s22, 1
          %s137 = smul.addr %s136, 8
          %s138 = scalar_lea.vmem [#allocation2], %s137
          %s140 = ssub.s32 128, 128
          %141 = vsyncadd %s135, %s140
          %s142 = smul.addr %s12, 128
          %s143 = scalar_lea.hbm %s0, %s142
          %s145 = sshll.u32 %s138, 4
          %s146 = int_to_ptr.vmem [resolvable:$true] %s145
          %148 = dma.hbm_to_vmem [thread:$0]  %s143, 128, %s146, %s135
        $region28: #{tpu_custom_call.1} parent=23 // pred_fallthru
          _
      $region24: #{tpu_custom_call.1} parent=5 // pred_fallthru
        _
      %p149 = scmp.le.s32.totalorder 1, %s12
      %p150 = scmp.lt.s32.totalorder %s12, 3
      %p151 = pnand %p149, %p150
      %p152 = pneg %p151
      // Predicated region
      $region29: #{tpu_custom_call.1} parent=5 // pred_check
        _
      $region30: #{tpu_custom_call.1} parent=5 // pred_check_branch
        %154 = sbr.rel (%p151) target = $region32
      $region31: #{tpu_custom_call.1} parent=5 // pred_region
        %s155 = ssub.s32 %s12, 1
        %s156 = sand.u32 %s25, 1
        %s157 = scalar_lea.sflag [#allocation3], %s156
        %s158 = sand.u32 %s25, 1
        %s159 = smul.addr %s158, 8
        %s160 = scalar_lea.vmem [#allocation2], %s159
        // Predicated region
        $region33: #{tpu_custom_call.1} parent=31 // pred_check
          %p161 = pneg %p38
        $region34: #{tpu_custom_call.1} parent=31 // pred_check_branch
          %163 = sbr.rel (%p161) target = $region36
        $region35: #{tpu_custom_call.1} parent=31 // pred_region
          %164 = dma.done %s157, 128
        $region36: #{tpu_custom_call.1} parent=31 // pred_fallthru
          _
        %s165 = sand.u32 %s25, 1
        %s166 = scalar_lea.sflag [#allocation3], %s165
        %s167 = sand.u32 %s25, 1
        %s168 = smul.addr %s167, 8
        %s169 = scalar_lea.vmem [#allocation2], %s168
        %p170 = pneg %p38
        %p171 = pneg %p35
        %p172 = pneg %p59
        %p173 = pneg %p56
        %p174 = pneg %p80
        %p175 = pneg %p77
        %p176 = pneg %p106
        %p177 = pneg %p103
        %p178 = scmp.lt.s32.totalorder %s17, 1
        %s179 = scalar_select %p178, %s17, 1
        %s180 = smul.addr %s179, 8
        %s181 = scalar_lea.vmem %s3, %s180
        %p182 = scmp.lt.s32.totalorder %s17, 1
        %s183 = scalar_select %p182, %s17, 1
        %s184 = smul.addr %s183, 8
        %s185 = scalar_lea.vmem %s3, %s184
        %v186 = vld [vmem:[%s160] sm:$0xff]
        %vm187 = vcmask 261120
        %v188 = vsel %vm187, %v186, 0.0
        %v189 = vrot.slane %v188, 4
        %v190 = vadd.f32 %v188, %v189
        %v191 = vrot.slane %v190, 2
        %v192 = vadd.f32 %v190, %v191
        %v193 = vrot.slane %v192, 1
        %v194 = vadd.f32 %v192, %v193
        %v195 = vmul.f32 %v194, 0.125
        %v196 = vmul.f32 %v186, %v195
        %vm197 = vcmp.ge.f32.partialorder %v196, 0.0
        %v198 = vmul.f32 %v196, 0.01
        %v199 = vsel %vm197, %v196, %v198
        %v200 = vsel %vm187, %v199, 0.0
        %v201 = vrot.slane %v200, 4
        %v202 = vadd.f32 %v200, %v201
        %v203 = vrot.slane %v202, 2
        %v204 = vadd.f32 %v202, %v203
        %v205 = vrot.slane %v204, 1
        %v206 = vadd.f32 %v204, %v205
        %v207 = vmul.f32 %v206, 0.125
        %v208 = vmul.f32 %v199, %v207
        %vm209 = vcmp.ge.f32.partialorder %v208, 0.0
        %v210 = vmul.f32 %v208, 0.01
        %v211 = vsel %vm209, %v208, %v210
        %vm212 = vcmask 261121
        %v213 = vsel %vm212, %v211, 0.0
        %214 = vadd.xlane.f32.xlu0 %v213
        %v215 = vpop.xlane.xlu0 %214
        %v216 = vrcp.pop 32.0
        %v217 = vmul.f32 %v215, %v216
        %v218 = vsub.f32 %v211, %v217
        %v219 = vmul.f32 %v218, %v218
        %v220 = vsel %vm212, %v219, 0.0
        %221 = vadd.xlane.f32.xlu0 %v220
        %v222 = vpop.xlane.xlu0 %221
        %v223 = vmul.f32 %v222, %v216
        %v224 = vadd.f32 %v223, 1e-05
        %v225 = vrsqrt.pop %v224
        %v226 = vld [vmem:[%s1] sm:$0x1]
        %v227 = vld [vmem:[%s2] sm:$0x1]
        %v228 = vmul.f32 %v218, %v225
        %v230 = vlaneseq
        %v231 = vshrl.u32 %v230, 7
        %v232 = vsub.s32 0, %v231
        %v233 = vrot.slane %v226, %v232
        %v235 = vmul.f32 %v228, %v233
        %v237 = vlaneseq
        %v238 = vshrl.u32 %v237, 7
        %v239 = vsub.s32 0, %v238
        %v240 = vrot.slane %v227, %v239
        %v242 = vadd.f32 %v235, %v240
        %244 = vrot.lane.b32.xlu0 %v242, 32
        %v245 = vpop.permute.xlu0 %244
        %v247 = vsel %vm187, %v199, %v245
        %vm248 = vcmask 523265
        %249 = vst.msk [vmem:[%s185 - $0x1] sm:$0xfe] %vm248, %v247
        %p250 = scmp.lt.s32.totalorder %s17, 1
        %s251 = scalar_select %p250, %s17, 1
        %s252 = smul.addr %s251, 8
        %s253 = scalar_lea.vmem %s3, %s252
        // Predicated region
        $region37: #{tpu_custom_call.1} parent=31 // pred_check
          %p254 = pneg %p103
        $region38: #{tpu_custom_call.1} parent=31 // pred_check_branch
          %256 = sbr.rel (%p254) target = $region40
        $region39: #{tpu_custom_call.1} parent=31 // pred_region
          _
        $region40: #{tpu_custom_call.1} parent=31 // pred_fallthru
          _
      $region32: #{tpu_custom_call.1} parent=5 // pred_fallthru
        _
      %p257 = scmp.le.s32.totalorder 2, %s12
      // Predicated region
      $region41: #{tpu_custom_call.1} parent=5 // pred_check
        %p258 = pneg %p257
      $region42: #{tpu_custom_call.1} parent=5 // pred_check_branch
        %260 = sbr.rel (%p258) target = $region44
      $region43: #{tpu_custom_call.1} parent=5 // pred_region
        %s261 = ssub.s32 %s12, 2
        // Predicated region
        $region45: #{tpu_custom_call.1} parent=43 // pred_check
          %p262 = pneg %p109
        $region46: #{tpu_custom_call.1} parent=43 // pred_check_branch
          %264 = sbr.rel (%p262) target = $region48
        $region47: #{tpu_custom_call.1} parent=43 // pred_region
          %p265 = scmp.lt.s32.totalorder %s18, 1
          %s266 = scalar_select %p265, %s18, 1
          %s267 = smul.addr %s266, 8
          %s268 = scalar_lea.vmem %s3, %s267
        $region48: #{tpu_custom_call.1} parent=43 // pred_fallthru
          _
      $region44: #{tpu_custom_call.1} parent=5 // pred_fallthru
        _
    $region6: #{tpu_custom_call.1} parent=1 // loop_footer
      %s16 = sadd.s32 1, %s12
    $region7: #{tpu_custom_call.1} parent=1 // loop_footer_branch
      %11 = sbr.rel target = $region3
    $region8: #{tpu_custom_call.1} parent=1 // loop_exit
      _
    %269 = vsyncpa [#allocation3], 1
    %s270 = scalar_lea.sflag [#allocation3], 1
    %271 = vsyncpa %s270, 1

</llo_original>
